<compile_context>
chip_gen: v5e
topology: v5e:2x2
jax: 0.10.0
libtpu: 0.0.40
codegen_flags: <defaults>
</compile_context>

<pallas_src>
import functools

import jax
import jax.numpy as jnp
from jax import lax
from jax.experimental import pallas as pl
from jax.experimental.pallas import tpu as pltpu

EPS = 1e-20


def _round_up(a, b):
    return (a + b - 1) // b * b


# ----------------------------------------------------------------------------
# Pallas kernels
# ----------------------------------------------------------------------------
def _dwconv_kernel(p_ref, w_ref, b_ref, o_ref):
    # p_ref: (TILE_N, Cin*K*K)  im2col patches for TILE_N output positions
    # w_ref: (Cin*K*K, Cout)    block-diagonal grouped-conv weight
    # b_ref: (1, Cout)          bias (fused epilogue)
    # o_ref: (TILE_N, Cout)     lane-dense output
    acc = jnp.dot(p_ref[...], w_ref[...], preferred_element_type=jnp.float32)
    o_ref[...] = (acc + b_ref[...]).astype(o_ref.dtype)


def _dwconv_squash_kernel(p_ref, w_ref, b_ref, g_ref, o_ref):
    # Fused conv + bias + per-capsule Squash. Valid when HoWo == 1, i.e. each
    # output row holds exactly nc complete capsules of dc contiguous lanes.
    # g_ref: (Cout, Cout) block-diagonal 0/1 matrix; (y*y) @ g yields the
    # per-capsule sum-of-squares broadcast back to every lane of its capsule,
    # so the reduction stays on the MXU (no lane-axis relayout).
    y = jnp.dot(p_ref[...], w_ref[...], preferred_element_type=jnp.float32)
    y = y + b_ref[...]
    sumsq = jnp.dot(y * y, g_ref[...], preferred_element_type=jnp.float32)
    norm = jnp.sqrt(sumsq)
    coef = 1.0 - 1.0 / (jnp.exp(norm) + EPS)
    o_ref[...] = (y * (coef / (norm + EPS))).astype(o_ref.dtype)


def _squash_kernel(x_ref, o_ref):
    # x_ref / o_ref: (dc, TILE_C) -- capsule index on the lane axis,
    # capsule dimension (reduction axis) on the sublane axis.
    x = x_ref[...]
    sumsq = jnp.sum(x * x, axis=0, keepdims=True)        # cheap sublane reduce
    norm = jnp.sqrt(sumsq)
    coef = 1.0 - 1.0 / (jnp.exp(norm) + EPS)
    scale = coef / (norm + EPS)                          # per-capsule scalar
    o_ref[...] = x * scale


# ----------------------------------------------------------------------------
# Wrapper
# ----------------------------------------------------------------------------
@functools.partial(jax.jit, static_argnames=("kernel_size", "capsule_size", "stride"))
def primary_caps_forward(x, weight, bias, *, kernel_size, capsule_size, stride=1):
    """Pallas implementation of PrimaryCaps.forward.

    x:      (B, Cin, H, W)  float32 (NCHW, as in PyTorch)
    weight: (Cout, 1, K, K) float32 (PyTorch grouped-conv layout, groups=Cin)
    bias:   (Cout,)         float32
    returns (-1, num_capsules, dim_capsules) float32
    """
    B, Cin, H, W = x.shape
    K = kernel_size
    nc, dc = capsule_size
    Cout = nc * dc
    assert Cout % Cin == 0, "grouped conv requires Cout % Cin == 0"
    M = Cout // Cin
    KK = K * K
    CKK = Cin * KK
    Ho = (H - K) // stride + 1
    Wo = (W - K) // stride + 1
    HoWo = Ho * Wo
    N = B * HoWo

    # --- im2col: single XLA primitive, no Python spatial loops --------------
    # patches: (B, Cin*K*K, Ho, Wo), feature dim ordered channel-major (c,kh,kw).
    # TODO(synk): gather the KxK windows inside the kernel (index_map over
    # (b, ho) row bands) to avoid materializing the ~K^2/stride^2 patch tensor.
    patches = lax.conv_general_dilated_patches(
        x, (K, K), (stride, stride), "VALID",
        dimension_numbers=("NCHW", "OIHW", "NCHW"),
        precision=lax.Precision.HIGHEST)
    p2 = jnp.transpose(patches, (0, 2, 3, 1)).reshape(N, CKK)

    # --- block-diagonal grouped-conv weight + bias ---------------------------
    # weight[o=c*M+m, 0, kh, kw] -> Wb[c*KK + k, c*M + m], zeros off-block.
    w3 = jnp.transpose(weight.reshape(Cin, M, KK), (0, 2, 1))        # (Cin, KK, M)
    wb = jnp.einsum("ckm,cd->ckdm", w3,
                    jnp.eye(Cin, dtype=w3.dtype)).reshape(CKK, Cout)
    b2 = bias.reshape(1, Cout)

    # --- N tiling for the conv matmul ---------------------------------------
    tile_n = 512 if N >= 512 else _round_up(N, 8)
    n_pad = _round_up(N, tile_n)
    if n_pad != N:
        p2 = jnp.pad(p2, ((0, n_pad - N), (0, 0)))

    if HoWo == 1:
        # --- fused conv + Squash (capsules are dc contiguous lanes) ----------
        cap_id = jnp.arange(Cout, dtype=jnp.int32) // dc
        gmat = (cap_id[:, None] == cap_id[None, :]).astype(jnp.float32)  # (Cout, Cout)

        out = pl.pallas_call(
            _dwconv_squash_kernel,
            out_shape=jax.ShapeDtypeStruct((n_pad, Cout), jnp.float32),
            grid=(n_pad // tile_n,),
            in_specs=[
                pl.BlockSpec((tile_n, CKK), lambda i: (i, 0)),
                pl.BlockSpec((CKK, Cout), lambda i: (0, 0)),
                pl.BlockSpec((1, Cout), lambda i: (0, 0)),
                pl.BlockSpec((Cout, Cout), lambda i: (0, 0)),
            ],
            out_specs=pl.BlockSpec((tile_n, Cout), lambda i: (i, 0)),
            compiler_params=pltpu.CompilerParams(
                dimension_semantics=("parallel",)),
        )(p2, wb, b2, gmat)                               # (n_pad, Cout)
        # PyTorch view(-1, nc, dc) on a (B, Cout, 1, 1) conv output is exactly
        # this row-major reshape -- no transposes needed.
        return out[:N].reshape(-1, nc, dc)

    # --- generic path: conv kernel, then lane-dense Squash kernel ------------
    conv2d = pl.pallas_call(
        _dwconv_kernel,
        out_shape=jax.ShapeDtypeStruct((n_pad, Cout), jnp.float32),
        grid=(n_pad // tile_n,),
        in_specs=[
            pl.BlockSpec((tile_n, CKK), lambda i: (i, 0)),
            pl.BlockSpec((CKK, Cout), lambda i: (0, 0)),
            pl.BlockSpec((1, Cout), lambda i: (0, 0)),
        ],
        out_specs=pl.BlockSpec((tile_n, Cout), lambda i: (i, 0)),
        compiler_params=pltpu.CompilerParams(
            dimension_semantics=("parallel",)),
    )(p2, wb, b2)                                        # (n_pad, Cout)

    # Reproduce the exact PyTorch `view(-1, nc, dc)` ordering: conv2d rows are
    # (b, ho, wo); PyTorch flattens (B, Cout, Ho, Wo) in C order.
    # TODO(synk): fold this rearrangement into the conv out_spec index_map so
    # the intermediate isn't round-tripped through HBM when HoWo > 1.
    y = conv2d[:N].reshape(B, HoWo, Cout)
    y = jnp.transpose(y, (0, 2, 1))                      # (B, Cout, HoWo)
    flat = y.reshape(-1, dc)                             # (n_capsules, dc)
    n_caps = flat.shape[0]

    # Squash on a lane-dense (dc, n_capsules) layout.
    caps_t = flat.T                                      # (dc, n_caps)
    tile_c = 4096 if n_caps >= 4096 else _round_up(n_caps, 128)
    c_pad = _round_up(n_caps, tile_c)
    if c_pad != n_caps:
        # zero-padded capsules squash to exactly zero (no NaN/Inf), sliced off.
        caps_t = jnp.pad(caps_t, ((0, 0), (0, c_pad - n_caps)))

    squashed = pl.pallas_call(
        _squash_kernel,
        out_shape=jax.ShapeDtypeStruct((dc, c_pad), jnp.float32),
        grid=(c_pad // tile_c,),
        in_specs=[pl.BlockSpec((dc, tile_c), lambda i: (0, i))],
        out_specs=pl.BlockSpec((dc, tile_c), lambda i: (0, i)),
        compiler_params=pltpu.CompilerParams(
            dimension_semantics=("parallel",)),
    )(caps_t)

    return squashed[:, :n_caps].T.reshape(-1, nc, dc)


# ----------------------------------------------------------------------------
# Pure-JAX reference (silent correctness check)
# ----------------------------------------------------------------------------
def _reference(x, weight, bias, K, nc, dc, stride):
    y = lax.conv_general_dilated(
        x, weight, window_strides=(stride, stride), padding="VALID",
        dimension_numbers=("NCHW", "OIHW", "NCHW"),
        feature_group_count=x.shape[1],
        precision=lax.Precision.HIGHEST)
    y = y + bias.reshape(1, -1, 1, 1)
    y = y.reshape(-1, nc, dc)
    norm = jnp.linalg.norm(y, ord=2, axis=-1, keepdims=True)
    coef = 1.0 - 1.0 / (jnp.exp(norm) + EPS)
    return coef * y / (norm + EPS)


if __name__ == "__main__":
    key = jax.random.PRNGKey(0)
    kx, kw, kb, kx2 = jax.random.split(key, 4)

    capsule_size = (16, 8)           # num_capsules=16, dim_capsules=8 -> Cout=128
    nc, dc = capsule_size
    Cout = nc * dc
    Cin = 8
    K = 9
    weight = 0.1 * jax.random.normal(kw, (Cout, 1, K, K), jnp.float32)
    bias = 0.1 * jax.random.normal(kb, (Cout,), jnp.float32)

    # Config 1: HoWo > 1 (generic conv-kernel + squash-kernel path).
    B, H, W, stride = 2, 11, 11, 2   # -> Ho = Wo = 2
    x = jax.random.normal(kx, (B, Cin, H, W), jnp.float32)
    out = primary_caps_forward(
        x, weight, bias, kernel_size=K, capsule_size=capsule_size, stride=stride)
    out = jax.block_until_ready(out)
    ref = _reference(x, weight, bias, K, nc, dc, stride)
    assert out.shape == ref.shape, (out.shape, ref.shape)
    assert jnp.allclose(out, ref, atol=1e-5, rtol=1e-5), "mismatch (generic path)"

    # Config 2: HoWo == 1 (canonical PrimaryCaps; fully fused conv+squash kernel).
    B2, H2, W2, stride2 = 2, 9, 9, 1  # -> Ho = Wo = 1
    x2 = jax.random.normal(kx2, (B2, Cin, H2, W2), jnp.float32)
    out2 = primary_caps_forward(
        x2, weight, bias, kernel_size=K, capsule_size=capsule_size, stride=stride2)
    out2 = jax.block_until_ready(out2)
    ref2 = _reference(x2, weight, bias, K, nc, dc, stride2)
    assert out2.shape == ref2.shape, (out2.shape, ref2.shape)
    assert jnp.allclose(out2, ref2, atol=1e-5, rtol=1e-5), "mismatch (fused path)"

    print("KERNEL_OK")
</pallas_src>

<mosaic_0001>
module attributes {stable_mosaic.version = 11 : i64} {
  func.func @_dwconv_kernel(%arg0: i32, %arg1: memref<8x648xf32, #tpu.memory_space<vmem>>, %arg2: memref<648x128xf32, #tpu.memory_space<vmem>>, %arg3: memref<1x128xf32, #tpu.memory_space<vmem>>, %arg4: memref<8x128xf32, #tpu.memory_space<vmem>>) attributes {dimension_semantics = [#tpu.dimension_semantics<parallel>], iteration_bounds = array<i64: 1>, scalar_prefetch = 0 : i64, scratch_operands = 0 : i64, tpu.core_type = #tpu.core_type<tc>, window_params = [{transform_indices = @transform_0, window_bounds = array<i64: 8, 648>}, {pipeline_mode = #tpu.pipeline_mode<synchronous>, transform_indices = @transform_1, window_bounds = array<i64: 648, 128>}, {pipeline_mode = #tpu.pipeline_mode<synchronous>, transform_indices = @transform_2, window_bounds = array<i64: 1, 128>}, {transform_indices = @transform_3, window_bounds = array<i64: 8, 128>}]} {
    %c0 = arith.constant 0 : index
    %c0_0 = arith.constant 0 : index
    %0 = vector.load %arg1[%c0, %c0_0] : memref<8x648xf32, #tpu.memory_space<vmem>>, vector<8x648xf32>
    %c0_1 = arith.constant 0 : index
    %c0_2 = arith.constant 0 : index
    %1 = vector.load %arg2[%c0_1, %c0_2] : memref<648x128xf32, #tpu.memory_space<vmem>>, vector<648x128xf32>
    %cst = arith.constant dense<0.000000e+00> : vector<8x128xf32>
    %2 = tpu.matmul %0, %1, %cst {dimension_numbers = #tpu.dot_dimension_numbers<[1], [0], [0], [1], [0, 0, 1, 1], [], []>} : vector<8x648xf32>, vector<648x128xf32>, vector<8x128xf32> -> vector<8x128xf32>
    %c0_3 = arith.constant 0 : index
    %c0_4 = arith.constant 0 : index
    %3 = vector.load %arg3[%c0_3, %c0_4] : memref<1x128xf32, #tpu.memory_space<vmem>>, vector<1x128xf32>
    %4 = vector.broadcast %3 : vector<1x128xf32> to vector<8x128xf32>
    %5 = arith.addf %2, %4 : vector<8x128xf32>
    %c0_5 = arith.constant 0 : index
    %c0_6 = arith.constant 0 : index
    %6 = vector.load %arg4[%c0_5, %c0_6] : memref<8x128xf32, #tpu.memory_space<vmem>>, vector<8x128xf32>
    tpu.vector_store %arg4[%c0_5, %c0_6], %5 {strides = array<i32>} : memref<8x128xf32, #tpu.memory_space<vmem>>, vector<8x128xf32>,
    return
  }
  func.func @transform_0(%arg0: i32) -> (i32, i32) {
    %c0_i32 = arith.constant 0 : i32
    %c0_i32_0 = arith.constant 0 : i32
    return %arg0, %c0_i32 : i32, i32
  }
  func.func @transform_1(%arg0: i32) -> (i32, i32) {
    %c0_i32 = arith.constant 0 : i32
    %c0_i32_0 = arith.constant 0 : i32
    %c0_i32_1 = arith.constant 0 : i32
    return %c0_i32, %c0_i32_0 : i32, i32
  }
  func.func @transform_2(%arg0: i32) -> (i32, i32) {
    %c0_i32 = arith.constant 0 : i32
    %c0_i32_0 = arith.constant 0 : i32
    %c0_i32_1 = arith.constant 0 : i32
    return %c0_i32, %c0_i32_0 : i32, i32
  }
  func.func @transform_3(%arg0: i32) -> (i32, i32) {
    %c0_i32 = arith.constant 0 : i32
    %c0_i32_0 = arith.constant 0 : i32
    return %arg0, %c0_i32 : i32, i32
  }
}

module attributes {stable_mosaic.version = 11 : i64} {
  func.func @_squash_kernel(%arg0: i32, %arg1: memref<8x128xf32, #tpu.memory_space<vmem>>, %arg2: memref<8x128xf32, #tpu.memory_space<vmem>>) attributes {dimension_semantics = [#tpu.dimension_semantics<parallel>], iteration_bounds = array<i64: 1>, scalar_prefetch = 0 : i64, scratch_operands = 0 : i64, tpu.core_type = #tpu.core_type<tc>, window_params = [{transform_indices = @transform_0, window_bounds = array<i64: 8, 128>}, {transform_indices = @transform_1, window_bounds = array<i64: 8, 128>}]} {
    %c0 = arith.constant 0 : index
    %c0_0 = arith.constant 0 : index
    %0 = vector.load %arg1[%c0, %c0_0] : memref<8x128xf32, #tpu.memory_space<vmem>>, vector<8x128xf32>
    %1 = arith.mulf %0, %0 : vector<8x128xf32>
    %cst = arith.constant dense<0.000000e+00> : vector<128xf32>
    %2 = vector.multi_reduction <add>, %1, %cst [0] : vector<8x128xf32> to vector<128xf32>
    %3 = vector.shape_cast %2 : vector<128xf32> to vector<1x128xf32>
    %4 = math.sqrt %3 : vector<1x128xf32>
    %5 = math.exp %4 : vector<1x128xf32>
    %cst_1 = arith.constant 9.99999968E-21 : f32
    %6 = vector.broadcast %cst_1 : f32 to vector<1x128xf32>
    %7 = arith.addf %5, %6 : vector<1x128xf32>
    %cst_2 = arith.constant 1.000000e+00 : f32
    %8 = vector.broadcast %cst_2 : f32 to vector<1x128xf32>
    %9 = arith.divf %8, %7 : vector<1x128xf32>
    %cst_3 = arith.constant 1.000000e+00 : f32
    %10 = vector.broadcast %cst_3 : f32 to vector<1x128xf32>
    %11 = arith.subf %10, %9 : vector<1x128xf32>
    %cst_4 = arith.constant 9.99999968E-21 : f32
    %12 = vector.broadcast %cst_4 : f32 to vector<1x128xf32>
    %13 = arith.addf %4, %12 : vector<1x128xf32>
    %14 = arith.divf %11, %13 : vector<1x128xf32>
    %15 = vector.broadcast %14 : vector<1x128xf32> to vector<8x128xf32>
    %16 = arith.mulf %0, %15 : vector<8x128xf32>
    %c0_5 = arith.constant 0 : index
    %c0_6 = arith.constant 0 : index
    %17 = vector.load %arg2[%c0_5, %c0_6] : memref<8x128xf32, #tpu.memory_space<vmem>>, vector<8x128xf32>
    tpu.vector_store %arg2[%c0_5, %c0_6], %16 {strides = array<i32>} : memref<8x128xf32, #tpu.memory_space<vmem>>, vector<8x128xf32>,
    return
  }
  func.func @transform_0(%arg0: i32) -> (i32, i32) {
    %c0_i32 = arith.constant 0 : i32
    %c0_i32_0 = arith.constant 0 : i32
    return %c0_i32, %arg0 : i32, i32
  }
  func.func @transform_1(%arg0: i32) -> (i32, i32) {
    %c0_i32 = arith.constant 0 : i32
    %c0_i32_0 = arith.constant 0 : i32
    return %c0_i32, %arg0 : i32, i32
  }
}

</mosaic_0001>

<llo_original>
// kernel: primary_caps_forward.3
$region0: #{primary_caps_forward.3}
  #allocation0 [shape = 'u32[]', space=smem, size = 0x4, offset = 0x4, fixed_abs, tag = 'smem constant byte address 0x4 - core index']
  #allocation1 [shape = 'u32[72,128]{1,0:T(1,128)}', space=vmem, size = 0x9000, scoped, tag = 'internal scratch']
  %s0 = inlined_call_operand.vmem [shape: f32[8,128], index: 0, kind: input, shape index: {}]
  %s1 = inlined_call_operand.vmem [shape: f32[8,128], index: 1, kind: output, shape index: {}]
  %s2 = sld [smem:[#allocation0]]
  $region14: #{primary_caps_forward.3} parent=0
    _
  %s4 = ssub.s32 1, %s2
  %s5 = scalar_select 0, %s4, %s2
  // Predicated region
  $region2: #{primary_caps_forward.3} parent=0 // pred_check
    _
  $region3: #{primary_caps_forward.3} parent=0 // pred_check_branch
    %7 = sbr.rel (0) target = $region5
  $region4: #{primary_caps_forward.3} parent=0 // pred_region
    _
  $region5: #{primary_caps_forward.3} parent=0 // pred_fallthru
    _
  %v8 = vld [vmem:[%s0] sm:$0xff]
  %v9 = vmul.f32 %v8, %v8
  %v10 = vrot.slane %v9, 4
  %v11 = vadd.f32 %v9, %v10
  %v12 = vrot.slane %v11, 2
  %v13 = vadd.f32 %v11, %v12
  %v14 = vrot.slane %v13, 1
  %v15 = vadd.f32 %v13, %v14
  %v16 = vrsqrt.pop %v15
  %v17 = vmul.f32 %v16, %v15
  %v18 = vmul.f32 %v17, %v16
  %v19 = vmul.f32 0.5, %v18
  %v20 = vsub.f32 1.5, %v19
  %v21 = vmul.f32 %v16, %v20
  %v22 = vmul.f32 %v15, %v21
  %vm23 = vcmp.eq.f32.partialorder %v15, inf
  %v24 = vsel %vm23, %v15, %v22
  %vm25 = vcmp.eq.f32.partialorder %v15, 0.0
  %v26 = vand.u32 %v15, 2147483648
  %v27 = vsel %vm25, %v26, %v24
  %v28 = vmul.f32 %v27, 1.442695
  %v29 = vpow.pop %v28
  %v30 = vadd.f32 %v29, 1e-20
  %v31 = vrcp.pop %v30
  %v32 = vmul.f32 %v30, %v31
  %v33 = vsub.f32 1.0, %v32
  %v34 = vmul.f32 %v31, %v33
  %v35 = vadd.f32 %v31, %v34
  %vm36 = vweird.f32 %v30
  %vm37 = vweird.f32 %v31
  %vm38 = vmor %vm36, %vm37
  %v39 = vsel %vm38, %v31, %v35
  %v40 = vand.u32 2147483647, %v30
  %vm41 = vcmp.eq.f32.partialorder %v40, 8.507059e+37
  %v42 = vand.u32 %v30, 2147483648
  %v43 = vor.u32 1.1754944e-38, %v42
  %v44 = vsel %vm41, %v43, %v39
  %v45 = vmul.f32 1.0, %v44
  %v46 = vsub.f32 1.0, %v45
  %v47 = vadd.f32 %v27, 1e-20
  %v48 = vrcp.pop %v47
  %v49 = vmul.f32 %v47, %v48
  %v50 = vsub.f32 1.0, %v49
  %v51 = vmul.f32 %v48, %v50
  %v52 = vadd.f32 %v48, %v51
  %vm53 = vweird.f32 %v47
  %vm54 = vweird.f32 %v48
  %vm55 = vmor %vm53, %vm54
  %v56 = vsel %vm55, %v48, %v52
  %v57 = vand.u32 2147483647, %v47
  %vm58 = vcmp.eq.f32.partialorder %v57, 8.507059e+37
  %v59 = vand.u32 %v47, 2147483648
  %v60 = vor.u32 1.1754944e-38, %v59
  %v61 = vsel %vm58, %v60, %v56
  %v62 = vmul.f32 %v46, %v61
  %v63 = vmul.f32 %v8, %v62
  %64 = vst [vmem:[%s1] sm:$0xff] %v63
  // Predicated region
  $region6: #{primary_caps_forward.3} parent=0 // pred_check
    _
  $region7: #{primary_caps_forward.3} parent=0 // pred_check_branch
    %66 = sbr.rel (0) target = $region9
  $region8: #{primary_caps_forward.3} parent=0 // pred_region
    _
  $region9: #{primary_caps_forward.3} parent=0 // pred_fallthru
    _
  // Predicated region
  $region10: #{primary_caps_forward.3} parent=0 // pred_check
    _
  $region11: #{primary_caps_forward.3} parent=0 // pred_check_branch
    %68 = sbr.rel (0) target = $region13
  $region12: #{primary_caps_forward.3} parent=0 // pred_region
    _
  $region13: #{primary_caps_forward.3} parent=0 // pred_fallthru
    _

// kernel: primary_caps_forward.2
$region0: #{primary_caps_forward.2}
  #allocation0 [shape = 'u32[]', space=smem, size = 0x4, offset = 0x4, fixed_abs, tag = 'smem constant byte address 0x4 - core index']
  #allocation1 [shape = 'u32[72,128]{1,0:T(1,128)}', space=vmem, size = 0x9000, scoped, tag = 'internal scratch']
  %s0 = inlined_call_operand.vmem [shape: f32[8,648], index: 0, kind: input, shape index: {}]
  %s1 = inlined_call_operand.vmem [shape: f32[648,128], index: 1, kind: input, shape index: {}]
  %s2 = inlined_call_operand.vmem [shape: f32[1,128], index: 2, kind: input, shape index: {}]
  %s3 = inlined_call_operand.vmem [shape: f32[8,128], index: 3, kind: output, shape index: {}]
  %s4 = sld [smem:[#allocation0]]
  $region22: #{primary_caps_forward.2} parent=0
    _
  %s6 = ssub.s32 1, %s4
  %s7 = scalar_select 0, %s6, %s4
  // Predicated region
  $region2: #{primary_caps_forward.2} parent=0 // pred_check
    _
  $region3: #{primary_caps_forward.2} parent=0 // pred_check_branch
    %9 = sbr.rel (0) target = $region5
  $region4: #{primary_caps_forward.2} parent=0 // pred_region
    _
  $region5: #{primary_caps_forward.2} parent=0 // pred_fallthru
    _
  // Predicated region
  $region6: #{primary_caps_forward.2} parent=0 // pred_check
    _
  $region7: #{primary_caps_forward.2} parent=0 // pred_check_branch
    %11 = sbr.rel (0) target = $region9
  $region8: #{primary_caps_forward.2} parent=0 // pred_region
    _
  $region9: #{primary_caps_forward.2} parent=0 // pred_fallthru
    _
  // Predicated region
  $region10: #{primary_caps_forward.2} parent=0 // pred_check
    _
  $region11: #{primary_caps_forward.2} parent=0 // pred_check_branch
    %13 = sbr.rel (0) target = $region13
  $region12: #{primary_caps_forward.2} parent=0 // pred_region
    _
  $region13: #{primary_caps_forward.2} parent=0 // pred_fallthru
    _
  %v14 = vld [vmem:[%s0] sm:$0xff]
  %v15 = vld [vmem:[%s0 + $0x8] sm:$0xff]
  %v16 = vld [vmem:[%s0 + $0x10] sm:$0xff]
  %v17 = vld [vmem:[%s0 + $0x18] sm:$0xff]
  %v18 = vld [vmem:[%s0 + $0x20] sm:$0xff]
  %v19 = vld [vmem:[%s0 + $0x28] sm:$0xff]
  %v20 = vld [vmem:[%s1] sm:$0xff]
  %v21 = vld [vmem:[%s1 + $0x8] sm:$0xff]
  %v22 = vld [vmem:[%s1 + $0x10] sm:$0xff]
  %v23 = vld [vmem:[%s1 + $0x18] sm:$0xff]
  %v24 = vld [vmem:[%s1 + $0x20] sm:$0xff]
  %v25 = vld [vmem:[%s1 + $0x28] sm:$0xff]
  %v26 = vld [vmem:[%s1 + $0x30] sm:$0xff]
  %v27 = vld [vmem:[%s1 + $0x38] sm:$0xff]
  %v28 = vld [vmem:[%s1 + $0x40] sm:$0xff]
  %v29 = vld [vmem:[%s1 + $0x48] sm:$0xff]
  %v30 = vld [vmem:[%s1 + $0x50] sm:$0xff]
  %v31 = vld [vmem:[%s1 + $0x58] sm:$0xff]
  %v32 = vld [vmem:[%s1 + $0x60] sm:$0xff]
  %v33 = vld [vmem:[%s1 + $0x68] sm:$0xff]
  %v34 = vld [vmem:[%s1 + $0x70] sm:$0xff]
  %v35 = vld [vmem:[%s1 + $0x78] sm:$0xff]
  %v36 = vld [vmem:[%s1 + $0x80] sm:$0xff]
  %v37 = vld [vmem:[%s1 + $0x88] sm:$0xff]
  %v38 = vld [vmem:[%s1 + $0x90] sm:$0xff]
  %v39 = vld [vmem:[%s1 + $0x98] sm:$0xff]
  %v40 = vld [vmem:[%s1 + $0xa0] sm:$0xff]
  %v41 = vld [vmem:[%s1 + $0xa8] sm:$0xff]
  %v42 = vld [vmem:[%s1 + $0xb0] sm:$0xff]
  %v43 = vld [vmem:[%s1 + $0xb8] sm:$0xff]
  %v44 = vld [vmem:[%s1 + $0xc0] sm:$0xff]
  %v45 = vld [vmem:[%s1 + $0xc8] sm:$0xff]
  %v46 = vld [vmem:[%s1 + $0xd0] sm:$0xff]
  %v47 = vld [vmem:[%s1 + $0xd8] sm:$0xff]
  %v48 = vld [vmem:[%s1 + $0xe0] sm:$0xff]
  %v49 = vld [vmem:[%s1 + $0xe8] sm:$0xff]
  %v50 = vld [vmem:[%s1 + $0xf0] sm:$0xff]
  %v51 = vld [vmem:[%s1 + $0xf8] sm:$0xff]
  %v52 = vld [vmem:[%s1 + $0x100] sm:$0xff]
  %v53 = vld [vmem:[%s1 + $0x108] sm:$0xff]
  %v54 = vld [vmem:[%s1 + $0x110] sm:$0xff]
  %v55 = vld [vmem:[%s1 + $0x118] sm:$0xff]
  %v56 = vld [vmem:[%s1 + $0x120] sm:$0xff]
  %v57 = vld [vmem:[%s1 + $0x128] sm:$0xff]
  %v58 = vld [vmem:[%s1 + $0x130] sm:$0xff]
  %v59 = vld [vmem:[%s1 + $0x138] sm:$0xff]
  %v60 = vld [vmem:[%s1 + $0x140] sm:$0xff]
  %v61 = vld [vmem:[%s1 + $0x148] sm:$0xff]
  %v62 = vld [vmem:[%s1 + $0x150] sm:$0xff]
  %v63 = vld [vmem:[%s1 + $0x158] sm:$0xff]
  %v64 = vld [vmem:[%s1 + $0x160] sm:$0xff]
  %v65 = vld [vmem:[%s1 + $0x168] sm:$0xff]
  %v66 = vld [vmem:[%s1 + $0x170] sm:$0xff]
  %v67 = vld [vmem:[%s1 + $0x178] sm:$0xff]
  %v68 = vld [vmem:[%s1 + $0x180] sm:$0xff]
  %v69 = vld [vmem:[%s1 + $0x188] sm:$0xff]
  %v70 = vld [vmem:[%s1 + $0x190] sm:$0xff]
  %v71 = vld [vmem:[%s1 + $0x198] sm:$0xff]
  %v72 = vld [vmem:[%s1 + $0x1a0] sm:$0xff]
  %v73 = vld [vmem:[%s1 + $0x1a8] sm:$0xff]
  %v74 = vld [vmem:[%s1 + $0x1b0] sm:$0xff]
  %v75 = vld [vmem:[%s1 + $0x1b8] sm:$0xff]
  %v76 = vld [vmem:[%s1 + $0x1c0] sm:$0xff]
  %v77 = vld [vmem:[%s1 + $0x1c8] sm:$0xff]
  %v78 = vld [vmem:[%s1 + $0x1d0] sm:$0xff]
  %v79 = vld [vmem:[%s1 + $0x1d8] sm:$0xff]
  %v80 = vld [vmem:[%s1 + $0x1e0] sm:$0xff]
  %v81 = vld [vmem:[%s1 + $0x1e8] sm:$0xff]
  %v82 = vld [vmem:[%s1 + $0x1f0] sm:$0xff]
  %v83 = vld [vmem:[%s1 + $0x1f8] sm:$0xff]
  %v84 = vld [vmem:[%s1 + $0x200] sm:$0xff]
  %v85 = vld [vmem:[%s1 + $0x208] sm:$0xff]
  %v86 = vld [vmem:[%s1 + $0x210] sm:$0xff]
  %v87 = vld [vmem:[%s1 + $0x218] sm:$0xff]
  %v88 = vld [vmem:[%s1 + $0x220] sm:$0xff]
  %v89 = vld [vmem:[%s1 + $0x228] sm:$0xff]
  %v90 = vld [vmem:[%s1 + $0x230] sm:$0xff]
  %v91 = vld [vmem:[%s1 + $0x238] sm:$0xff]
  %v92 = vld [vmem:[%s1 + $0x240] sm:$0xff]
  %v93 = vld [vmem:[%s1 + $0x248] sm:$0xff]
  %v94 = vld [vmem:[%s1 + $0x250] sm:$0xff]
  %v95 = vld [vmem:[%s1 + $0x258] sm:$0xff]
  %v96 = vld [vmem:[%s1 + $0x260] sm:$0xff]
  %v97 = vld [vmem:[%s1 + $0x268] sm:$0xff]
  %v98 = vld [vmem:[%s1 + $0x270] sm:$0xff]
  %v99 = vld [vmem:[%s1 + $0x278] sm:$0xff]
  %v100 = vld [vmem:[%s1 + $0x280] sm:$0xff]
  %v101 = vld [vmem:[%s2] sm:$0x1]
  %v103 = vperm.slane %v101, 0
  %vm105 = vcmask 64512
  %v107 = vsel %vm105, %v19, 0
  %109 = vmatpush.msra.mxu0 %v35
  %110 = vmatpush.msra.mxu0 %v34
  %111 = vmatpush.msra.mxu0 %v33
  %112 = vmatpush.msra.mxu0 %v32
  %113 = vmatpush.msra.mxu0 %v31
  %114 = vmatpush.msra.mxu0 %v30
  %115 = vmatpush.msra.mxu0 %v29
  %116 = vmatpush.msra.mxu0 %v28
  %117 = vmatpush.msra.mxu0 %v27
  %118 = vmatpush.msra.mxu0 %v26
  %119 = vmatpush.msra.mxu0 %v25
  %120 = vmatpush.msra.mxu0 %v24
  %121 = vmatpush.msra.mxu0 %v23
  %122 = vmatpush.msra.mxu0 %v22
  %123 = vmatpush.msra.mxu0 %v21
  %124 = vmatpush.msra.mxu0 %v20
  %125 = vmatmul.f32.gmra.mxu0 %v14
  %v126 = vpop.f32.mrf.mxu0
  %v127 = vadd.f32 %v103, %v126
  %128 = vdwg.mxu0
  %129 = vmatpush.msra.mxu0 %v51
  %130 = vmatpush.msra.mxu0 %v50
  %131 = vmatpush.msra.mxu0 %v49
  %132 = vmatpush.msra.mxu0 %v48
  %133 = vmatpush.msra.mxu0 %v47
  %134 = vmatpush.msra.mxu0 %v46
  %135 = vmatpush.msra.mxu0 %v45
  %136 = vmatpush.msra.mxu0 %v44
  %137 = vmatpush.msra.mxu0 %v43
  %138 = vmatpush.msra.mxu0 %v42
  %139 = vmatpush.msra.mxu0 %v41
  %140 = vmatpush.msra.mxu0 %v40
  %141 = vmatpush.msra.mxu0 %v39
  %142 = vmatpush.msra.mxu0 %v38
  %143 = vmatpush.msra.mxu0 %v37
  %144 = vmatpush.msra.mxu0 %v36
  %145 = vmatmul.f32.gmra.mxu0 %v15
  %v146 = vpop.f32.mrf.mxu0
  %v147 = vadd.f32 %v127, %v146
  %148 = vdwg.mxu0
  %149 = vmatpush.msra.mxu0 %v67
  %150 = vmatpush.msra.mxu0 %v66
  %151 = vmatpush.msra.mxu0 %v65
  %152 = vmatpush.msra.mxu0 %v64
  %153 = vmatpush.msra.mxu0 %v63
  %154 = vmatpush.msra.mxu0 %v62
  %155 = vmatpush.msra.mxu0 %v61
  %156 = vmatpush.msra.mxu0 %v60
  %157 = vmatpush.msra.mxu0 %v59
  %158 = vmatpush.msra.mxu0 %v58
  %159 = vmatpush.msra.mxu0 %v57
  %160 = vmatpush.msra.mxu0 %v56
  %161 = vmatpush.msra.mxu0 %v55
  %162 = vmatpush.msra.mxu0 %v54
  %163 = vmatpush.msra.mxu0 %v53
  %164 = vmatpush.msra.mxu0 %v52
  %165 = vmatmul.f32.gmra.mxu0 %v16
  %v166 = vpop.f32.mrf.mxu0
  %v167 = vadd.f32 %v147, %v166
  %168 = vdwg.mxu0
  %169 = vmatpush.msra.mxu0 %v83
  %170 = vmatpush.msra.mxu0 %v82
  %171 = vmatpush.msra.mxu0 %v81
  %172 = vmatpush.msra.mxu0 %v80
  %173 = vmatpush.msra.mxu0 %v79
  %174 = vmatpush.msra.mxu0 %v78
  %175 = vmatpush.msra.mxu0 %v77
  %176 = vmatpush.msra.mxu0 %v76
  %177 = vmatpush.msra.mxu0 %v75
  %178 = vmatpush.msra.mxu0 %v74
  %179 = vmatpush.msra.mxu0 %v73
  %180 = vmatpush.msra.mxu0 %v72
  %181 = vmatpush.msra.mxu0 %v71
  %182 = vmatpush.msra.mxu0 %v70
  %183 = vmatpush.msra.mxu0 %v69
  %184 = vmatpush.msra.mxu0 %v68
  %185 = vmatmul.f32.gmra.mxu0 %v17
  %v186 = vpop.f32.mrf.mxu0
  %v187 = vadd.f32 %v167, %v186
  %188 = vdwg.mxu0
  %189 = vmatpush.msra.mxu0 %v99
  %190 = vmatpush.msra.mxu0 %v98
  %191 = vmatpush.msra.mxu0 %v97
  %192 = vmatpush.msra.mxu0 %v96
  %193 = vmatpush.msra.mxu0 %v95
  %194 = vmatpush.msra.mxu0 %v94
  %195 = vmatpush.msra.mxu0 %v93
  %196 = vmatpush.msra.mxu0 %v92
  %197 = vmatpush.msra.mxu0 %v91
  %198 = vmatpush.msra.mxu0 %v90
  %199 = vmatpush.msra.mxu0 %v89
  %200 = vmatpush.msra.mxu0 %v88
  %201 = vmatpush.msra.mxu0 %v87
  %202 = vmatpush.msra.mxu0 %v86
  %203 = vmatpush.msra.mxu0 %v85
  %204 = vmatpush.msra.mxu0 %v84
  %205 = vmatmul.f32.gmra.mxu0 %v18
  %v206 = vpop.f32.mrf.mxu0
  %v207 = vadd.f32 %v187, %v206
  %208 = vdwg.mxu0
  %209 = vmatpush.msra.mxu0 0.0
  %210 = vmatpush.msra.mxu0 0.0
  %211 = vmatpush.msra.mxu0 0.0
  %212 = vmatpush.msra.mxu0 0.0
  %213 = vmatpush.msra.mxu0 0.0
  %214 = vmatpush.msra.mxu0 0.0
  %215 = vmatpush.msra.mxu0 0.0
  %216 = vmatpush.msra.mxu0 0.0
  %217 = vmatpush.msra.mxu0 0.0
  %218 = vmatpush.msra.mxu0 0.0
  %219 = vmatpush.msra.mxu0 0.0
  %220 = vmatpush.msra.mxu0 0.0
  %221 = vmatpush.msra.mxu0 0.0
  %222 = vmatpush.msra.mxu0 0.0
  %223 = vmatpush.msra.mxu0 0.0
  %224 = vmatpush.msra.mxu0 %v100
  %225 = vmatmul.f32.gmra.mxu0 %v107
  %v226 = vpop.f32.mrf.mxu0
  %v227 = vadd.f32 %v207, %v226
  %228 = vdwg.mxu0
  %229 = vst [vmem:[%s3] sm:$0xff] %v227
  // Predicated region
  $region14: #{primary_caps_forward.2} parent=0 // pred_check
    _
  $region15: #{primary_caps_forward.2} parent=0 // pred_check_branch
    %231 = sbr.rel (0) target = $region17
  $region16: #{primary_caps_forward.2} parent=0 // pred_region
    _
  $region17: #{primary_caps_forward.2} parent=0 // pred_fallthru
    _
  // Predicated region
  $region18: #{primary_caps_forward.2} parent=0 // pred_check
    _
  $region19: #{primary_caps_forward.2} parent=0 // pred_check_branch
    %233 = sbr.rel (0) target = $region21
  $region20: #{primary_caps_forward.2} parent=0 // pred_region
    _
  $region21: #{primary_caps_forward.2} parent=0 // pred_fallthru
    _

</llo_original>
